<compile_context>
chip_gen: v6e
topology: v6e:2x2x1
jax: 0.10.0
libtpu: 0.0.40
codegen_flags: <defaults>
</compile_context>

<pallas_src>
import functools

import jax
import jax.numpy as jnp
from jax.experimental import pallas as pl
from jax.experimental.pallas import tpu as pltpu


# ---------------------------------------------------------------------------
# Pallas kernel: fused (conv1x1 + BN(eval) + ReLU)^L  +  max over K neighbours
# ---------------------------------------------------------------------------
def _sa_mlp_kernel(tile_s, k_neighbors, *refs):
    x_ref = refs[0]            # [1, tile_s*K, C_in]
    out_ref = refs[-1]         # [1, tile_s, C_last]
    wb = refs[1:-1]            # (w0, b0, w1, b1, ...)
    num_layers = len(wb) // 2

    h = x_ref[0]                                             # [tile_s*K, C_in]
    for i in range(num_layers):
        w = wb[2 * i][...]                                   # [C_prev, C_i]
        b = wb[2 * i + 1][...]                               # [1, C_i]
        h = jnp.maximum(
            jnp.dot(h, w, preferred_element_type=jnp.float32) + b, 0.0)

    # max-pool over the K neighbours (leading-dim split only; lane dim kept)
    h = h.reshape(tile_s, k_neighbors, h.shape[-1])
    out_ref[0] = jnp.max(h, axis=1)


def _choose_tile_s(S, K, channels, budget_bytes=4 * 1024 * 1024):
    """Largest point-tile that divides S, keeps the output block (8,128)-legal
    (tile % 8 == 0 or tile == S) and keeps the per-step VMEM working set under
    `budget_bytes` (Pallas double-buffers each block)."""
    max_c = max(channels)
    bytes_per_point = 4 * (K * channels[0] + K * max_c + channels[-1])
    last_valid = S
    for t in range(S, 0, -1):
        if S % t != 0:
            continue
        if t % 8 != 0 and t != S:
            continue
        last_valid = t
        if t * bytes_per_point <= budget_bytes:
            return t
    return last_valid


def pointnet_sa_mlp_pallas(new_points, folded_ws, folded_bs, *, tile_s=None):
    """new_points: [B, S, K, C_in] grouped features (channels-last).
    folded_ws[i]: [C_{i-1}, C_i], folded_bs[i]: [1, C_i] (conv+BN folded)."""
    B, S, K, C_in = new_points.shape
    channels = [int(C_in)] + [int(w.shape[1]) for w in folded_ws]
    C_last = channels[-1]

    if tile_s is None:
        tile_s = _choose_tile_s(S, K, channels)
    assert S % tile_s == 0 and (tile_s % 8 == 0 or tile_s == S)
    grid = (B, S // tile_s)

    # 3-D slab [B, S*K, C_in]: avoids a 4-D VMEM block and lets the kernel use
    # the rows directly for the MXU matmuls (no lane-dim-changing reshape).
    x_flat = new_points.reshape(B, S * K, C_in)

    in_specs = [pl.BlockSpec((1, tile_s * K, C_in), lambda b, s: (b, s, 0))]
    args = [x_flat]
    for w, bvec in zip(folded_ws, folded_bs):
        ci, co = int(w.shape[0]), int(w.shape[1])
        in_specs.append(pl.BlockSpec((ci, co), lambda b, s: (0, 0)))
        in_specs.append(pl.BlockSpec((1, co), lambda b, s: (0, 0)))
        args.extend([w, bvec])

    out_spec = pl.BlockSpec((1, tile_s, C_last), lambda b, s: (b, s, 0))

    flops = 2 * B * S * K * sum(channels[i] * channels[i + 1]
                                for i in range(len(folded_ws)))
    bytes_accessed = 4 * (int(x_flat.size)
                          + sum(int(w.size) + int(bv.size)
                                for w, bv in zip(folded_ws, folded_bs))
                          + B * S * C_last)

    return pl.pallas_call(
        functools.partial(_sa_mlp_kernel, tile_s, K),
        out_shape=jax.ShapeDtypeStruct((B, S, C_last), jnp.float32),
        grid_spec=pltpu.PrefetchScalarGridSpec(
            num_scalar_prefetch=0,
            grid=grid,
            in_specs=in_specs,
            out_specs=out_spec,
        ),
        compiler_params=pltpu.CompilerParams(
            dimension_semantics=("parallel", "parallel"),
            vmem_limit_bytes=32 * 1024 * 1024,
        ),
        cost_estimate=pl.CostEstimate(
            flops=int(flops), transcendentals=0,
            bytes_accessed=int(bytes_accessed)),
    )(*args)


# ---------------------------------------------------------------------------
# Plain-JAX glue (sampling / grouping) — mirrors the PyTorch helpers.
# ---------------------------------------------------------------------------
def square_distance(src, dst):
    return jnp.sum((src[:, :, None, :] - dst[:, None, :, :]) ** 2, axis=-1)


def index_points(points, idx):
    """points [B, N, C], idx [B, S] or [B, S, K] -> [B, S, (K,) C]."""
    B = points.shape[0]
    flat = idx.reshape(B, -1)
    out = jnp.take_along_axis(points, flat[:, :, None], axis=1)
    return out.reshape(*idx.shape, points.shape[-1])


def farthest_point_sample(xyz, npoint):
    # TODO(synk): FPS is an inherently sequential data-dependent argmax loop;
    # kept in XLA (lax.fori_loop). Deterministic start at index 0 instead of
    # torch.randint.
    B, N, _ = xyz.shape

    def body(i, carry):
        centroids, distance, farthest = carry
        centroids = centroids.at[:, i].set(farthest)
        centroid = jnp.take_along_axis(xyz, farthest[:, None, None], axis=1)
        dist = jnp.sum((xyz - centroid) ** 2, axis=-1)
        distance = jnp.minimum(distance, dist)
        farthest = jnp.argmax(distance, axis=-1).astype(jnp.int32)
        return centroids, distance, farthest

    centroids0 = jnp.zeros((B, npoint), dtype=jnp.int32)
    distance0 = jnp.full((B, N), 1e10, dtype=jnp.float32)
    farthest0 = jnp.zeros((B,), dtype=jnp.int32)
    centroids, _, _ = jax.lax.fori_loop(0, npoint, body,
                                        (centroids0, distance0, farthest0))
    return centroids


def query_ball_point(radius, nsample, xyz, new_xyz):
    B, N, _ = xyz.shape
    S = new_xyz.shape[1]
    sqrdists = square_distance(new_xyz, xyz)
    group_idx = jnp.broadcast_to(jnp.arange(N, dtype=jnp.int32), (B, S, N))
    group_idx = jnp.where(sqrdists > radius ** 2, N, group_idx)
    group_idx = jnp.sort(group_idx, axis=-1)[:, :, :nsample]
    group_first = jnp.broadcast_to(group_idx[:, :, :1], group_idx.shape)
    return jnp.where(group_idx == N, group_first, group_idx)


def sample_and_group(npoint, radius, nsample, xyz, points, knn=False):
    fps_idx = farthest_point_sample(xyz, npoint)
    new_xyz = index_points(xyz, fps_idx)                       # [B, S, 3]
    if knn:
        # top_k instead of full argsort (perf feedback); tie order may differ
        # from torch argsort but the neighbour set is the same.
        dists = square_distance(new_xyz, xyz)                  # [B, S, N]
        _, idx = jax.lax.top_k(-dists, nsample)                # [B, S, K]
    else:
        idx = query_ball_point(radius, nsample, xyz, new_xyz)
    grouped_xyz = index_points(xyz, idx)                       # [B, S, K, 3]
    grouped_xyz_norm = grouped_xyz - new_xyz[:, :, None, :]
    if points is not None:
        grouped_points = index_points(points, idx)             # [B, S, K, D]
        new_points = jnp.concatenate([grouped_xyz_norm, grouped_points], -1)
    else:
        new_points = grouped_xyz_norm
    return new_xyz, new_points


def sample_and_group_all(xyz, points):
    B, N, C = xyz.shape
    new_xyz = jnp.zeros((B, 1, C), dtype=xyz.dtype)
    grouped_xyz = xyz[:, None, :, :]
    if points is not None:
        new_points = jnp.concatenate([grouped_xyz, points[:, None, :, :]], -1)
    else:
        new_points = grouped_xyz
    return new_xyz, new_points


# ---------------------------------------------------------------------------
# Parameter handling (Conv2d 1x1 + BatchNorm2d, eval mode, folded)
# ---------------------------------------------------------------------------
def _fold_conv_bn(layer, eps=1e-5):
    # TODO(synk): BatchNorm is folded in eval mode (running stats); training-
    # mode batch statistics are not implemented.
    scale = layer["bn_gamma"] / jnp.sqrt(layer["bn_var"] + eps)    # [C_out]
    w = layer["conv_w"].T * scale[None, :]                          # [C_in, C_out]
    b = (layer["conv_b"] - layer["bn_mean"]) * scale + layer["bn_beta"]
    return w.astype(jnp.float32), b[None, :].astype(jnp.float32)


def init_params(key, in_channel, mlp):
    params = []
    last = in_channel
    for out_c in mlp:
        key, k1, k2, k3, k4, k5, k6 = jax.random.split(key, 7)
        params.append(dict(
            conv_w=0.2 * jax.random.normal(k1, (out_c, last), dtype=jnp.float32),
            conv_b=0.1 * jax.random.normal(k2, (out_c,), dtype=jnp.float32),
            bn_gamma=1.0 + 0.1 * jax.random.normal(k3, (out_c,), dtype=jnp.float32),
            bn_beta=0.1 * jax.random.normal(k4, (out_c,), dtype=jnp.float32),
            bn_mean=0.1 * jax.random.normal(k5, (out_c,), dtype=jnp.float32),
            bn_var=jnp.abs(1.0 + 0.1 * jax.random.normal(k6, (out_c,), dtype=jnp.float32)),
        ))
        last = out_c
    return params


def pointnet_set_abstraction_forward(xyz, points, params, *, npoint, radius,
                                     nsample, group_all, knn=False,
                                     tile_s=None):
    if group_all:
        new_xyz, new_points = sample_and_group_all(xyz, points)
    else:
        new_xyz, new_points = sample_and_group(npoint, radius, nsample, xyz,
                                               points, knn=knn)
    folded_ws, folded_bs = [], []
    for layer in params:
        w, b = _fold_conv_bn(layer)
        folded_ws.append(w)
        folded_bs.append(b)
    feats = pointnet_sa_mlp_pallas(new_points.astype(jnp.float32),
                                   folded_ws, folded_bs, tile_s=tile_s)
    return new_xyz, feats


# ---------------------------------------------------------------------------
# Pure-JAX reference mirroring the PyTorch forward (eval-mode BN).
# ---------------------------------------------------------------------------
def reference_forward(xyz, points, params, *, npoint, radius, nsample,
                      group_all, knn=False, eps=1e-5):
    if group_all:
        new_xyz, new_points = sample_and_group_all(xyz, points)
    else:
        new_xyz, new_points = sample_and_group(npoint, radius, nsample, xyz,
                                               points, knn=knn)
    h = new_points                                              # [B, S, K, C]
    for layer in params:
        conv = jnp.einsum("bskc,oc->bsko", h, layer["conv_w"]) + layer["conv_b"]
        bn = ((conv - layer["bn_mean"]) / jnp.sqrt(layer["bn_var"] + eps)
              * layer["bn_gamma"] + layer["bn_beta"])
        h = jnp.maximum(bn, 0.0)
    return new_xyz, jnp.max(h, axis=2)


if __name__ == "__main__":
    B, N, D_feat = 2, 64, 4
    npoint, nsample, radius = 16, 8, 0.4
    mlp = [32, 64]
    in_channel = 3 + D_feat

    key = jax.random.PRNGKey(0)
    k_xyz, k_pts, k_par = jax.random.split(key, 3)
    xyz = jax.random.normal(k_xyz, (B, N, 3), dtype=jnp.float32)
    points = jax.random.normal(k_pts, (B, N, D_feat), dtype=jnp.float32)
    params = init_params(k_par, in_channel, mlp)

    # --- grouped (knn) path: tile_s=8 exercises a multi-tile (B, S/tile) grid
    new_xyz, new_feat = pointnet_set_abstraction_forward(
        xyz, points, params, npoint=npoint, radius=radius, nsample=nsample,
        group_all=False, knn=True, tile_s=8)
    jax.block_until_ready((new_xyz, new_feat))

    ref_xyz, ref_feat = reference_forward(
        xyz, points, params, npoint=npoint, radius=radius, nsample=nsample,
        group_all=False, knn=True)

    assert new_xyz.shape == (B, npoint, 3)
    assert new_feat.shape == (B, npoint, mlp[-1])
    assert jnp.allclose(new_xyz, ref_xyz, rtol=1e-4, atol=1e-4)
    assert jnp.allclose(new_feat, ref_feat, rtol=1e-3, atol=1e-3)

    # --- group_all path (S=1, K=N)
    ga_xyz, ga_feat = pointnet_set_abstraction_forward(
        xyz, points, params, npoint=None, radius=None, nsample=None,
        group_all=True)
    jax.block_until_ready((ga_xyz, ga_feat))
    _, ref_ga_feat = reference_forward(
        xyz, points, params, npoint=None, radius=None, nsample=None,
        group_all=True)
    assert ga_feat.shape == (B, 1, mlp[-1])
    assert jnp.allclose(ga_feat, ref_ga_feat, rtol=1e-3, atol=1e-3)

    print("KERNEL_OK")
</pallas_src>

<mosaic_0001>
module attributes {stable_mosaic.version = 11 : i64} {
  func.func @_sa_mlp_kernel(%arg0: i32, %arg1: i32, %arg2: memref<1x64x7xf32, #tpu.memory_space<vmem>>, %arg3: memref<7x32xf32, #tpu.memory_space<vmem>>, %arg4: memref<1x32xf32, #tpu.memory_space<vmem>>, %arg5: memref<32x64xf32, #tpu.memory_space<vmem>>, %arg6: memref<1x64xf32, #tpu.memory_space<vmem>>, %arg7: memref<1x8x64xf32, #tpu.memory_space<vmem>>) attributes {dimension_semantics = [#tpu.dimension_semantics<parallel>, #tpu.dimension_semantics<parallel>], iteration_bounds = array<i64: 2, 2>, scalar_prefetch = 0 : i64, scratch_operands = 0 : i64, tpu.core_type = #tpu.core_type<tc>, window_params = [{transform_indices = @transform_0, window_bounds = array<i64: 1, 64, 7>}, {pipeline_mode = #tpu.pipeline_mode<synchronous>, transform_indices = @transform_1, window_bounds = array<i64: 7, 32>}, {pipeline_mode = #tpu.pipeline_mode<synchronous>, transform_indices = @transform_2, window_bounds = array<i64: 1, 32>}, {pipeline_mode = #tpu.pipeline_mode<synchronous>, transform_indices = @transform_3, window_bounds = array<i64: 32, 64>}, {pipeline_mode = #tpu.pipeline_mode<synchronous>, transform_indices = @transform_4, window_bounds = array<i64: 1, 64>}, {transform_indices = @transform_5, window_bounds = array<i64: 1, 8, 64>}]} {
    %c0 = arith.constant 0 : index
    %c0_0 = arith.constant 0 : index
    %c0_1 = arith.constant 0 : index
    %0 = vector.load %arg2[%c0, %c0_0, %c0_1] : memref<1x64x7xf32, #tpu.memory_space<vmem>>, vector<1x64x7xf32>
    %1 = vector.shape_cast %0 : vector<1x64x7xf32> to vector<64x7xf32>
    %c0_2 = arith.constant 0 : index
    %c0_3 = arith.constant 0 : index
    %2 = vector.load %arg3[%c0_2, %c0_3] : memref<7x32xf32, #tpu.memory_space<vmem>>, vector<7x32xf32>
    %c0_4 = arith.constant 0 : index
    %c0_5 = arith.constant 0 : index
    %3 = vector.load %arg4[%c0_4, %c0_5] : memref<1x32xf32, #tpu.memory_space<vmem>>, vector<1x32xf32>
    %cst = arith.constant dense<0.000000e+00> : vector<64x32xf32>
    %4 = tpu.matmul %1, %2, %cst {dimension_numbers = #tpu.dot_dimension_numbers<[1], [0], [0], [1], [0, 0, 1, 1], [], []>} : vector<64x7xf32>, vector<7x32xf32>, vector<64x32xf32> -> vector<64x32xf32>
    %5 = vector.broadcast %3 : vector<1x32xf32> to vector<64x32xf32>
    %6 = arith.addf %4, %5 : vector<64x32xf32>
    %cst_6 = arith.constant 0.000000e+00 : f32
    %7 = vector.broadcast %cst_6 : f32 to vector<64x32xf32>
    %8 = arith.maximumf %6, %7 : vector<64x32xf32>
    %c0_7 = arith.constant 0 : index
    %c0_8 = arith.constant 0 : index
    %9 = vector.load %arg5[%c0_7, %c0_8] : memref<32x64xf32, #tpu.memory_space<vmem>>, vector<32x64xf32>
    %c0_9 = arith.constant 0 : index
    %c0_10 = arith.constant 0 : index
    %10 = vector.load %arg6[%c0_9, %c0_10] : memref<1x64xf32, #tpu.memory_space<vmem>>, vector<1x64xf32>
    %cst_11 = arith.constant dense<0.000000e+00> : vector<64x64xf32>
    %11 = tpu.matmul %8, %9, %cst_11 {dimension_numbers = #tpu.dot_dimension_numbers<[1], [0], [0], [1], [0, 0, 1, 1], [], []>} : vector<64x32xf32>, vector<32x64xf32>, vector<64x64xf32> -> vector<64x64xf32>
    %12 = vector.broadcast %10 : vector<1x64xf32> to vector<64x64xf32>
    %13 = arith.addf %11, %12 : vector<64x64xf32>
    %cst_12 = arith.constant 0.000000e+00 : f32
    %14 = vector.broadcast %cst_12 : f32 to vector<64x64xf32>
    %15 = arith.maximumf %13, %14 : vector<64x64xf32>
    %16 = vector.shape_cast %15 : vector<64x64xf32> to vector<8x8x64xf32>
    %cst_13 = arith.constant dense<0xFF800000> : vector<8x64xf32>
    %17 = vector.multi_reduction <maximumf>, %16, %cst_13 [1] : vector<8x8x64xf32> to vector<8x64xf32>
    %c0_14 = arith.constant 0 : index
    %c0_15 = arith.constant 0 : index
    %c0_16 = arith.constant 0 : index
    %18 = vector.load %arg7[%c0_14, %c0_15, %c0_16] : memref<1x8x64xf32, #tpu.memory_space<vmem>>, vector<1x8x64xf32>
    %19 = vector.shape_cast %18 : vector<1x8x64xf32> to vector<8x64xf32>
    %20 = vector.shape_cast %17 : vector<8x64xf32> to vector<1x8x64xf32>
    tpu.vector_store %arg7[%c0_14, %c0_15, %c0_16], %20 {strides = array<i32>} : memref<1x8x64xf32, #tpu.memory_space<vmem>>, vector<1x8x64xf32>,
    return
  }
  func.func @transform_0(%arg0: i32, %arg1: i32) -> (i32, i32, i32) {
    %c0_i32 = arith.constant 0 : i32
    %c0_i32_0 = arith.constant 0 : i32
    return %arg0, %arg1, %c0_i32 : i32, i32, i32
  }
  func.func @transform_1(%arg0: i32, %arg1: i32) -> (i32, i32) {
    %c0_i32 = arith.constant 0 : i32
    %c0_i32_0 = arith.constant 0 : i32
    %c0_i32_1 = arith.constant 0 : i32
    return %c0_i32, %c0_i32_0 : i32, i32
  }
  func.func @transform_2(%arg0: i32, %arg1: i32) -> (i32, i32) {
    %c0_i32 = arith.constant 0 : i32
    %c0_i32_0 = arith.constant 0 : i32
    %c0_i32_1 = arith.constant 0 : i32
    return %c0_i32, %c0_i32_0 : i32, i32
  }
  func.func @transform_3(%arg0: i32, %arg1: i32) -> (i32, i32) {
    %c0_i32 = arith.constant 0 : i32
    %c0_i32_0 = arith.constant 0 : i32
    %c0_i32_1 = arith.constant 0 : i32
    return %c0_i32, %c0_i32_0 : i32, i32
  }
  func.func @transform_4(%arg0: i32, %arg1: i32) -> (i32, i32) {
    %c0_i32 = arith.constant 0 : i32
    %c0_i32_0 = arith.constant 0 : i32
    %c0_i32_1 = arith.constant 0 : i32
    return %c0_i32, %c0_i32_0 : i32, i32
  }
  func.func @transform_5(%arg0: i32, %arg1: i32) -> (i32, i32, i32) {
    %c0_i32 = arith.constant 0 : i32
    %c0_i32_0 = arith.constant 0 : i32
    return %arg0, %arg1, %c0_i32 : i32, i32, i32
  }
}

</mosaic_0001>

<llo_original>
// kernel: tpu_custom_call.1
$region0: #{tpu_custom_call.1}
  #allocation0 [shape = 'u32[]', space=smem, size = 0x4, offset = 0x4, fixed_abs, tag = 'smem constant byte address 0x4 - core index']
  #allocation1 [shape = 'u32[144,128]{1,0:T(1,128)}', space=vmem, size = 0x12000, scoped, tag = 'internal scratch']
  %s0 = inlined_call_operand.vmem [shape: f32[2,128,7], index: 0, kind: input, shape index: {}]
  %s1 = inlined_call_operand.vmem [shape: f32[7,32], index: 1, kind: input, shape index: {}]
  %s2 = inlined_call_operand.vmem [shape: f32[1,32], index: 2, kind: input, shape index: {}]
  %s3 = inlined_call_operand.vmem [shape: f32[32,64], index: 3, kind: input, shape index: {}]
  %s4 = inlined_call_operand.vmem [shape: f32[1,64], index: 4, kind: input, shape index: {}]
  %s5 = inlined_call_operand.hbm [shape: f32[2,16,64], index: 5, kind: output, shape index: {}]
  %s6 = sld [smem:[#allocation0]]
  $region53: #{tpu_custom_call.1} parent=0
    _
  %s8 = ssub.s32 1, %s6
  %s9 = scalar_select 0, %s8, %s6
  $region1: #{tpu_custom_call.1} parent=0
    #allocation2 [shape = 'u8[8192]{0}', space=vmem, size = 0x2000, scoped, tag = 'output window, operand 0']
    #allocation3 [shape = 's32[2]{0}', space=sflag, size = 0x8, scoped, tag = 'scoped memory for tpu_custom_call.1']
    %10 = vsyncpa [#allocation3], 0
    %s11 = scalar_lea.sflag [#allocation3], 1
    %12 = vsyncpa %s11, 0
    loop: start=0, step=1, limit=6
    $region2: #{tpu_custom_call.1} parent=1 // loop_pre_header
      _
    $region3: #{tpu_custom_call.1} parent=1 // loop_header
      %s14 = sphi 0, %s18
      %p15 = scmp.ge.s32.totalorder %s14, 6
      %s21 = sphi 0, %s33
      %s22 = sphi 0, %s29
      %s23 = sphi 0, %s21
      %s24 = sphi 0, %s22
      %s25 = sphi 0, %s23
      %s26 = sphi 0, %s24
      %s38 = sphi 0, %s40
      %s41 = sphi 0, %s38
      %s42 = sphi 0, %s41
      %s58 = sphi 0, %s42
      %s62 = sphi 0, %s62
      %s64 = sphi 0, %s62
      %s65 = sphi 0, %s64
      %s79 = sphi 0, %s65
      %s83 = sphi 0, %s83
      %s85 = sphi 0, %s83
      %s86 = sphi 0, %s85
      %s100 = sphi 0, %s86
      %s104 = sphi 0, %s104
      %s106 = sphi 0, %s104
      %s107 = sphi 0, %s106
      %s121 = sphi 0, %s107
      %s125 = sphi 0, %s125
      %s127 = sphi 0, %s125
      %s128 = sphi 0, %s127
      %s142 = sphi 0, %s128
      %s150 = sphi 0, %s152
      %s153 = sphi 0, %s150
      %s154 = sphi 0, %s153
      %s170 = sphi 0, %s154
    $region4: #{tpu_custom_call.1} parent=1 // loop_header_branch
      %17 = sbr.rel (%p15) target = $region8
    $region5: #{tpu_custom_call.1} parent=1 // loop_body
      %s19 = ssub.s32 %s14, 1
      %s20 = ssub.s32 %s14, 2
      %s27 = sadd.s32 1, %s22
      %p28 = scmp.ge.s32.totalorder %s27, 2
      %s29 = scalar_select %p28, 0, %s27
      %s30 = sadd.s32 1, %s21
      %s31 = scalar_select %p28, %s30, %s21
      %p32 = scmp.ge.s32.totalorder %s31, 2
      %s33 = scalar_select %p32, 0, %s31
      %s34 = ssub.s32 %s21, %s33
      %s35 = ssub.s32 %s22, %s29
      %s36 = sor.u32 %s34, %s35
      %p37 = scmp.eq.s32.totalorder %s36, 0
      %s39 = sadd.s32 %s38, 1
      %s40 = scalar_select %p37, %s38, %s39
      %p43 = pneg %p37
      %p44 = scmp.eq.s32.totalorder %s14, 3
      %p45 = por %p43, %p44
      %p46 = scmp.ne.s32.totalorder %s38, %s41
      %p47 = scmp.eq.s32.totalorder %s14, 0
      %p48 = por %p46, %p47
      %p49 = scmp.ne.s32.totalorder %s38, %s41
      %p50 = scmp.eq.s32.totalorder %s19, 3
      %p51 = por %p49, %p50
      %p52 = scmp.ne.s32.totalorder %s41, %s42
      %p53 = scmp.eq.s32.totalorder %s19, 0
      %p54 = por %p52, %p53
      %p55 = scmp.ne.s32.totalorder %s41, %s42
      %p56 = scmp.eq.s32.totalorder %s20, 3
      %p57 = por %p55, %p56
      %p59 = scmp.ne.s32.totalorder %s42, %s58
      %p60 = scmp.eq.s32.totalorder %s20, 0
      %p61 = por %p59, %p60
      %s63 = sadd.s32 %s62, 1
      %p66 = scmp.eq.s32.totalorder %s14, 3
      %p67 = scmp.ne.s32.totalorder %s62, %s64
      %p68 = scmp.eq.s32.totalorder %s14, 0
      %p69 = por %p67, %p68
      %p70 = scmp.ne.s32.totalorder %s62, %s64
      %p71 = scmp.eq.s32.totalorder %s19, 3
      %p72 = por %p70, %p71
      %p73 = scmp.ne.s32.totalorder %s64, %s65
      %p74 = scmp.eq.s32.totalorder %s19, 0
      %p75 = por %p73, %p74
      %p76 = scmp.ne.s32.totalorder %s64, %s65
      %p77 = scmp.eq.s32.totalorder %s20, 3
      %p78 = por %p76, %p77
      %p80 = scmp.ne.s32.totalorder %s65, %s79
      %p81 = scmp.eq.s32.totalorder %s20, 0
      %p82 = por %p80, %p81
      %s84 = sadd.s32 %s83, 1
      %p87 = scmp.eq.s32.totalorder %s14, 3
      %p88 = scmp.ne.s32.totalorder %s83, %s85
      %p89 = scmp.eq.s32.totalorder %s14, 0
      %p90 = por %p88, %p89
      %p91 = scmp.ne.s32.totalorder %s83, %s85
      %p92 = scmp.eq.s32.totalorder %s19, 3
      %p93 = por %p91, %p92
      %p94 = scmp.ne.s32.totalorder %s85, %s86
      %p95 = scmp.eq.s32.totalorder %s19, 0
      %p96 = por %p94, %p95
      %p97 = scmp.ne.s32.totalorder %s85, %s86
      %p98 = scmp.eq.s32.totalorder %s20, 3
      %p99 = por %p97, %p98
      %p101 = scmp.ne.s32.totalorder %s86, %s100
      %p102 = scmp.eq.s32.totalorder %s20, 0
      %p103 = por %p101, %p102
      %s105 = sadd.s32 %s104, 1
      %p108 = scmp.eq.s32.totalorder %s14, 3
      %p109 = scmp.ne.s32.totalorder %s104, %s106
      %p110 = scmp.eq.s32.totalorder %s14, 0
      %p111 = por %p109, %p110
      %p112 = scmp.ne.s32.totalorder %s104, %s106
      %p113 = scmp.eq.s32.totalorder %s19, 3
      %p114 = por %p112, %p113
      %p115 = scmp.ne.s32.totalorder %s106, %s107
      %p116 = scmp.eq.s32.totalorder %s19, 0
      %p117 = por %p115, %p116
      %p118 = scmp.ne.s32.totalorder %s106, %s107
      %p119 = scmp.eq.s32.totalorder %s20, 3
      %p120 = por %p118, %p119
      %p122 = scmp.ne.s32.totalorder %s107, %s121
      %p123 = scmp.eq.s32.totalorder %s20, 0
      %p124 = por %p122, %p123
      %s126 = sadd.s32 %s125, 1
      %p129 = scmp.eq.s32.totalorder %s14, 3
      %p130 = scmp.ne.s32.totalorder %s125, %s127
      %p131 = scmp.eq.s32.totalorder %s14, 0
      %p132 = por %p130, %p131
      %p133 = scmp.ne.s32.totalorder %s125, %s127
      %p134 = scmp.eq.s32.totalorder %s19, 3
      %p135 = por %p133, %p134
      %p136 = scmp.ne.s32.totalorder %s127, %s128
      %p137 = scmp.eq.s32.totalorder %s19, 0
      %p138 = por %p136, %p137
      %p139 = scmp.ne.s32.totalorder %s127, %s128
      %p140 = scmp.eq.s32.totalorder %s20, 3
      %p141 = por %p139, %p140
      %p143 = scmp.ne.s32.totalorder %s128, %s142
      %p144 = scmp.eq.s32.totalorder %s20, 0
      %p145 = por %p143, %p144
      %s146 = ssub.s32 %s21, %s33
      %s147 = ssub.s32 %s22, %s29
      %s148 = sor.u32 %s146, %s147
      %p149 = scmp.eq.s32.totalorder %s148, 0
      %s151 = sadd.s32 %s150, 1
      %s152 = scalar_select %p149, %s150, %s151
      %p155 = pneg %p149
      %p156 = scmp.eq.s32.totalorder %s14, 3
      %p157 = por %p155, %p156
      %p158 = scmp.ne.s32.totalorder %s150, %s153
      %p159 = scmp.eq.s32.totalorder %s14, 0
      %p160 = por %p158, %p159
      %p161 = scmp.ne.s32.totalorder %s150, %s153
      %p162 = scmp.eq.s32.totalorder %s19, 3
      %p163 = por %p161, %p162
      %p164 = scmp.ne.s32.totalorder %s153, %s154
      %p165 = scmp.eq.s32.totalorder %s19, 0
      %p166 = por %p164, %p165
      %p167 = scmp.ne.s32.totalorder %s153, %s154
      %p168 = scmp.eq.s32.totalorder %s20, 3
      %p169 = por %p167, %p168
      %p171 = scmp.ne.s32.totalorder %s154, %s170
      %p172 = scmp.eq.s32.totalorder %s20, 0
      %p173 = por %p171, %p172
      %p174 = scmp.le.s32.totalorder 1, %s14
      %p175 = scmp.lt.s32.totalorder %s14, 5
      %p176 = pnand %p174, %p175
      %p177 = pneg %p176
      // Predicated region
      $region9: #{tpu_custom_call.1} parent=5 // pred_check
        _
      $region10: #{tpu_custom_call.1} parent=5 // pred_check_branch
        %179 = sbr.rel (%p176) target = $region12
      $region11: #{tpu_custom_call.1} parent=5 // pred_region
        %s180 = ssub.s32 %s14, 1
        // Predicated region
        $region13: #{tpu_custom_call.1} parent=11 // pred_check
          %p181 = pneg %p75
        $region14: #{tpu_custom_call.1} parent=11 // pred_check_branch
          %183 = sbr.rel (%p181) target = $region16
        $region15: #{tpu_custom_call.1} parent=11 // pred_region
          _
        $region16: #{tpu_custom_call.1} parent=11 // pred_fallthru
          _
        // Predicated region
        $region17: #{tpu_custom_call.1} parent=11 // pred_check
          %p184 = pneg %p96
        $region18: #{tpu_custom_call.1} parent=11 // pred_check_branch
          %186 = sbr.rel (%p184) target = $region20
        $region19: #{tpu_custom_call.1} parent=11 // pred_region
          _
        $region20: #{tpu_custom_call.1} parent=11 // pred_fallthru
          _
        // Predicated region
        $region21: #{tpu_custom_call.1} parent=11 // pred_check
          %p187 = pneg %p117
        $region22: #{tpu_custom_call.1} parent=11 // pred_check_branch
          %189 = sbr.rel (%p187) target = $region24
        $region23: #{tpu_custom_call.1} parent=11 // pred_region
          _
        $region24: #{tpu_custom_call.1} parent=11 // pred_fallthru
          _
        // Predicated region
        $region25: #{tpu_custom_call.1} parent=11 // pred_check
          %p190 = pneg %p138
        $region26: #{tpu_custom_call.1} parent=11 // pred_check_branch
          %192 = sbr.rel (%p190) target = $region28
        $region27: #{tpu_custom_call.1} parent=11 // pred_region
          _
        $region28: #{tpu_custom_call.1} parent=11 // pred_fallthru
          _
      $region12: #{tpu_custom_call.1} parent=5 // pred_fallthru
        _
      %p193 = scmp.lt.s32.totalorder %s14, 4
      // Predicated region
      $region29: #{tpu_custom_call.1} parent=5 // pred_check
        %p194 = pneg %p193
      $region30: #{tpu_custom_call.1} parent=5 // pred_check_branch
        %196 = sbr.rel (%p194) target = $region32
      $region31: #{tpu_custom_call.1} parent=5 // pred_region
        // Predicated region
        $region33: #{tpu_custom_call.1} parent=31 // pred_check
          %p197 = pneg %p48
        $region34: #{tpu_custom_call.1} parent=31 // pred_check_branch
          %199 = sbr.rel (%p197) target = $region36
        $region35: #{tpu_custom_call.1} parent=31 // pred_region
          %s200 = smul.u32 8, %s22
          %p201 = scmp.lt.s32.totalorder %s21, 1
          %s202 = scalar_select %p201, %s21, 1
          %p203 = scmp.lt.s32.totalorder %s200, 15
          %s204 = scalar_select %p203, %s200, 15
          %s205 = smul.addr %s202, 16
          %s206 = sadd.s32 %s204, %s205
          %s207 = smul.addr %s206, 8
          %s208 = scalar_lea.vmem %s0, %s207
          %s209 = smul.u32 8, %s22
        $region36: #{tpu_custom_call.1} parent=31 // pred_fallthru
          _
      $region32: #{tpu_custom_call.1} parent=5 // pred_fallthru
        _
      %p210 = scmp.le.s32.totalorder 1, %s14
      %p211 = scmp.lt.s32.totalorder %s14, 5
      %p212 = pnand %p210, %p211
      %p213 = pneg %p212
      // Predicated region
      $region37: #{tpu_custom_call.1} parent=5 // pred_check
        _
      $region38: #{tpu_custom_call.1} parent=5 // pred_check_branch
        %215 = sbr.rel (%p212) target = $region40
      $region39: #{tpu_custom_call.1} parent=5 // pred_region
        %s216 = ssub.s32 %s14, 1
        %s217 = smul.u32 8, %s24
        %p218 = scmp.lt.s32.totalorder %s23, 1
        %s219 = scalar_select %p218, %s23, 1
        %p220 = scmp.lt.s32.totalorder %s217, 15
        %s221 = scalar_select %p220, %s217, 15
        %s222 = smul.addr %s219, 16
        %s223 = sadd.s32 %s221, %s222
        %s224 = smul.addr %s223, 8
        %s225 = scalar_lea.vmem %s0, %s224
        %p226 = pneg %p54
        %p227 = pneg %p51
        %p228 = pneg %p75
        %p229 = pneg %p72
        %p230 = pneg %p96
        %p231 = pneg %p93
        %p232 = pneg %p117
        %p233 = pneg %p114
        %p234 = pneg %p138
        %p235 = pneg %p135
        %p236 = pneg %p166
        %p237 = pneg %p163
        %s238 = sand.u32 %s153, 1
        %s239 = scalar_lea.sflag [#allocation3], %s238
        %s240 = sand.u32 %s153, 1
        %s241 = smul.addr %s240, 8
        %s242 = scalar_lea.vmem [#allocation2], %s241
        %s243 = smul.u32 8, %s24
        %p244 = scmp.lt.s32.totalorder %s23, 1
        %s245 = scalar_select %p244, %s23, 1
        %p246 = scmp.lt.s32.totalorder %s243, 15
        %s247 = scalar_select %p246, %s243, 15
        %s248 = smul.addr %s245, 16
        %s249 = sadd.s32 %s247, %s248
        %s250 = smul.addr %s249, 8
        %s251 = scalar_lea.vmem %s0, %s250
        %s252 = smul.u32 8, %s24
        %v253 = vld [vmem:[%s251] sm:$0xff]
        %v254 = vld [vmem:[%s251 + $0x8] sm:$0xff]
        %v255 = vld [vmem:[%s251 + $0x10] sm:$0xff]
        %v256 = vld [vmem:[%s251 + $0x18] sm:$0xff]
        %v257 = vld [vmem:[%s251 + $0x20] sm:$0xff]
        %v258 = vld [vmem:[%s251 + $0x28] sm:$0xff]
        %v259 = vld [vmem:[%s251 + $0x30] sm:$0xff]
        %v260 = vld [vmem:[%s251 + $0x38] sm:$0xff]
        %v261 = vld [vmem:[%s1] sm:$0x7f]
        %v262 = vld [vmem:[%s2] sm:$0x1]
        %v264 = vlaneseq
        %v265 = vshrl.u32 %v264, 7
        %v266 = vsub.s32 0, %v265
        %v267 = vrot.slane %v262, %v266
        %vm269 = vcmask 56320
        %v271 = vsel %vm269, %v253, 0
        %v274 = vsel %vm269, %v254, 0
        %v277 = vsel %vm269, %v255, 0
        %v280 = vsel %vm269, %v256, 0
        %v283 = vsel %vm269, %v257, 0
        %v286 = vsel %vm269, %v258, 0
        %v289 = vsel %vm269, %v259, 0
        %v292 = vsel %vm269, %v260, 0
        %vm294 = vcmask 1046528
        %v296 = vsel %vm294, %v261, 0
        %298 = vmatprep.subr.mxu0 0.0
        %299 = vmatpush1.msra.mxu0 0.0
        %300 = vmatprep.subr.mxu0 0.0
        %301 = vmatpush1.msra.mxu0 0.0
        %302 = vmatprep.subr.mxu0 0.0
        %303 = vmatpush1.msra.mxu0 0.0
        %304 = vmatprep.subr.mxu0 0.0
        %305 = vmatpush1.msra.mxu0 0.0
        %306 = vmatprep.subr.mxu0 0.0
        %307 = vmatpush1.msra.mxu0 0.0
        %308 = vmatprep.subr.mxu0 0.0
        %309 = vmatpush1.msra.mxu0 0.0
        %310 = vmatprep.subr.mxu0 0.0
        %311 = vmatpush1.msra.mxu0 0.0
        %312 = vmatprep.subr.mxu0 0.0
        %313 = vmatpush1.msra.mxu0 0.0
        %314 = vmatprep.subr.mxu0 0.0
        %315 = vmatpush1.msra.mxu0 0.0
        %316 = vmatprep.subr.mxu0 0.0
        %317 = vmatpush1.msra.mxu0 0.0
        %318 = vmatprep.subr.mxu0 0.0
        %319 = vmatpush1.msra.mxu0 0.0
        %320 = vmatprep.subr.mxu0 0.0
        %321 = vmatpush1.msra.mxu0 0.0
        %322 = vmatprep.subr.mxu0 0.0
        %323 = vmatpush1.msra.mxu0 0.0
        %324 = vmatprep.subr.mxu0 0.0
        %325 = vmatpush1.msra.mxu0 0.0
        %326 = vmatprep.subr.mxu0 0.0
        %327 = vmatpush1.msra.mxu0 0.0
        %328 = vmatprep.subr.mxu0 0.0
        %329 = vmatpush1.msra.mxu0 %v296
        %330 = vmatprep.subr.mxu0 0.0
        %331 = vmatpush2.msra.mxu0 0.0
        %332 = vmatprep.subr.mxu0 0.0
        %333 = vmatpush2.msra.mxu0 0.0
        %334 = vmatprep.subr.mxu0 0.0
        %335 = vmatpush2.msra.mxu0 0.0
        %336 = vmatprep.subr.mxu0 0.0
        %337 = vmatpush2.msra.mxu0 0.0
        %338 = vmatprep.subr.mxu0 0.0
        %339 = vmatpush2.msra.mxu0 0.0
        %340 = vmatprep.subr.mxu0 0.0
        %341 = vmatpush2.msra.mxu0 0.0
        %342 = vmatprep.subr.mxu0 0.0
        %343 = vmatpush2.msra.mxu0 0.0
        %344 = vmatprep.subr.mxu0 0.0
        %345 = vmatpush2.msra.mxu0 0.0
        %346 = vmatprep.subr.mxu0 0.0
        %347 = vmatpush2.msra.mxu0 0.0
        %348 = vmatprep.subr.mxu0 0.0
        %349 = vmatpush2.msra.mxu0 0.0
        %350 = vmatprep.subr.mxu0 0.0
        %351 = vmatpush2.msra.mxu0 0.0
        %352 = vmatprep.subr.mxu0 0.0
        %353 = vmatpush2.msra.mxu0 0.0
        %354 = vmatprep.subr.mxu0 0.0
        %355 = vmatpush2.msra.mxu0 0.0
        %356 = vmatprep.subr.mxu0 0.0
        %357 = vmatpush2.msra.mxu0 0.0
        %358 = vmatprep.subr.mxu0 0.0
        %359 = vmatpush2.msra.mxu0 0.0
        %360 = vmatprep.subr.mxu0 0.0
        %361 = vmatpush2.msra.mxu0 0.0
        %362 = vmatprep.mubr.f32.mxu0 0.0
        %363 = vmatmul.mubr.f32.gmra.mxu0 %v271
        %v364 = vpop.f32.mrf.mxu0
        %v365 = vadd.f32 %v267, %v364
        %v366 = vpop.f32.mrf.mxu0
        %367 = vmatprep.mubr.f32.mxu0 0.0
        %368 = vmatmul.mubr.f32.gmra.mxu0 %v274
        %v369 = vpop.f32.mrf.mxu0
        %v370 = vadd.f32 %v267, %v369
        %v371 = vpop.f32.mrf.mxu0
        %372 = vmatprep.mubr.f32.mxu0 0.0
        %373 = vmatmul.mubr.f32.gmra.mxu0 %v277
        %v374 = vpop.f32.mrf.mxu0
        %v375 = vadd.f32 %v267, %v374
        %v376 = vpop.f32.mrf.mxu0
        %377 = vmatprep.mubr.f32.mxu0 0.0
        %378 = vmatmul.mubr.f32.gmra.mxu0 %v280
        %v379 = vpop.f32.mrf.mxu0
        %v380 = vadd.f32 %v267, %v379
        %v381 = vpop.f32.mrf.mxu0
        %382 = vmatprep.mubr.f32.mxu0 0.0
        %383 = vmatmul.mubr.f32.gmra.mxu0 %v283
        %v384 = vpop.f32.mrf.mxu0
        %v385 = vadd.f32 %v267, %v384
        %v386 = vpop.f32.mrf.mxu0
        %387 = vmatprep.mubr.f32.mxu0 0.0
        %388 = vmatmul.mubr.f32.gmra.mxu0 %v286
        %v389 = vpop.f32.mrf.mxu0
        %v390 = vadd.f32 %v267, %v389
        %v391 = vpop.f32.mrf.mxu0
        %392 = vmatprep.mubr.f32.mxu0 0.0
        %393 = vmatmul.mubr.f32.gmra.mxu0 %v289
        %v394 = vpop.f32.mrf.mxu0
        %v395 = vadd.f32 %v267, %v394
        %v396 = vpop.f32.mrf.mxu0
        %397 = vmatprep.mubr.f32.mxu0 0.0
        %398 = vmatmul.mubr.f32.gmra.mxu0 %v292
        %v399 = vpop.f32.mrf.mxu0
        %v400 = vadd.f32 %v267, %v399
        %v401 = vpop.f32.mrf.mxu0
        %402 = vdwg.mxu0
        %v403 = vmax.f32 %v365, 0.0
        %v404 = vmax.f32 %v370, 0.0
        %v405 = vmax.f32 %v375, 0.0
        %v406 = vmax.f32 %v380, 0.0
        %v407 = vmax.f32 %v385, 0.0
        %v408 = vmax.f32 %v390, 0.0
        %v409 = vmax.f32 %v395, 0.0
        %v410 = vmax.f32 %v400, 0.0
        %v411 = vld [vmem:[%s3] sm:$0xff]
        %v412 = vld [vmem:[%s3 + $0x8] sm:$0xff]
        %v413 = vld [vmem:[%s3 + $0x10] sm:$0xff]
        %v414 = vld [vmem:[%s3 + $0x18] sm:$0xff]
        %v415 = vld [vmem:[%s4] sm:$0x1]
        %v417 = vlaneseq
        %v418 = vshrl.u32 %v417, 7
        %v419 = vsub.s32 0, %v418
        %v420 = vrot.slane %v415, %v419
        %vm422 = vcmask 261120
        %v424 = vsel %vm422, %v403, 0
        %v427 = vsel %vm422, %v404, 0
        %v430 = vsel %vm422, %v405, 0
        %v433 = vsel %vm422, %v406, 0
        %v436 = vsel %vm422, %v407, 0
        %v439 = vsel %vm422, %v408, 0
        %v442 = vsel %vm422, %v409, 0
        %v445 = vsel %vm422, %v410, 0
        %447 = vmatprep.subr.mxu0 0.0
        %448 = vmatpush1.msra.mxu0 0.0
        %449 = vmatprep.subr.mxu0 0.0
        %450 = vmatpush1.msra.mxu0 0.0
        %451 = vmatprep.subr.mxu0 0.0
        %452 = vmatpush1.msra.mxu0 0.0
        %453 = vmatprep.subr.mxu0 0.0
        %454 = vmatpush1.msra.mxu0 0.0
        %455 = vmatprep.subr.mxu0 0.0
        %456 = vmatpush1.msra.mxu0 0.0
        %457 = vmatprep.subr.mxu0 0.0
        %458 = vmatpush1.msra.mxu0 0.0
        %459 = vmatprep.subr.mxu0 0.0
        %460 = vmatpush1.msra.mxu0 0.0
        %461 = vmatprep.subr.mxu0 0.0
        %462 = vmatpush1.msra.mxu0 0.0
        %463 = vmatprep.subr.mxu0 0.0
        %464 = vmatpush1.msra.mxu0 0.0
        %465 = vmatprep.subr.mxu0 0.0
        %466 = vmatpush1.msra.mxu0 0.0
        %467 = vmatprep.subr.mxu0 0.0
        %468 = vmatpush1.msra.mxu0 0.0
        %469 = vmatprep.subr.mxu0 0.0
        %470 = vmatpush1.msra.mxu0 0.0
        %471 = vmatprep.subr.mxu0 0.0
        %472 = vmatpush1.msra.mxu0 %v414
        %473 = vmatprep.subr.mxu0 0.0
        %474 = vmatpush1.msra.mxu0 %v413
        %475 = vmatprep.subr.mxu0 0.0
        %476 = vmatpush1.msra.mxu0 %v412
        %477 = vmatprep.subr.mxu0 0.0
        %478 = vmatpush1.msra.mxu0 %v411
        %479 = vmatprep.subr.mxu0 0.0
        %480 = vmatpush2.msra.mxu0 0.0
        %481 = vmatprep.subr.mxu0 0.0
        %482 = vmatpush2.msra.mxu0 0.0
        %483 = vmatprep.subr.mxu0 0.0
        %484 = vmatpush2.msra.mxu0 0.0
        %485 = vmatprep.subr.mxu0 0.0
        %486 = vmatpush2.msra.mxu0 0.0
        %487 = vmatprep.subr.mxu0 0.0
        %488 = vmatpush2.msra.mxu0 0.0
        %489 = vmatprep.subr.mxu0 0.0
        %490 = vmatpush2.msra.mxu0 0.0
        %491 = vmatprep.subr.mxu0 0.0
        %492 = vmatpush2.msra.mxu0 0.0
        %493 = vmatprep.subr.mxu0 0.0
        %494 = vmatpush2.msra.mxu0 0.0
        %495 = vmatprep.subr.mxu0 0.0
        %496 = vmatpush2.msra.mxu0 0.0
        %497 = vmatprep.subr.mxu0 0.0
        %498 = vmatpush2.msra.mxu0 0.0
        %499 = vmatprep.subr.mxu0 0.0
        %500 = vmatpush2.msra.mxu0 0.0
        %501 = vmatprep.subr.mxu0 0.0
        %502 = vmatpush2.msra.mxu0 0.0
        %503 = vmatprep.subr.mxu0 0.0
        %504 = vmatpush2.msra.mxu0 0.0
        %505 = vmatprep.subr.mxu0 0.0
        %506 = vmatpush2.msra.mxu0 0.0
        %507 = vmatprep.subr.mxu0 0.0
        %508 = vmatpush2.msra.mxu0 0.0
        %509 = vmatprep.subr.mxu0 0.0
        %510 = vmatpush2.msra.mxu0 0.0
        %511 = vmatprep.mubr.f32.mxu0 0.0
        %512 = vmatmul.mubr.f32.gmra.mxu0 %v424
        %v513 = vpop.f32.mrf.mxu0
        %v514 = vadd.f32 %v420, %v513
        %v515 = vpop.f32.mrf.mxu0
        %516 = vmatprep.mubr.f32.mxu0 0.0
        %517 = vmatmul.mubr.f32.gmra.mxu0 %v427
        %v518 = vpop.f32.mrf.mxu0
        %v519 = vadd.f32 %v420, %v518
        %v520 = vpop.f32.mrf.mxu0
        %521 = vmatprep.mubr.f32.mxu0 0.0
        %522 = vmatmul.mubr.f32.gmra.mxu0 %v430
        %v523 = vpop.f32.mrf.mxu0
        %v524 = vadd.f32 %v420, %v523
        %v525 = vpop.f32.mrf.mxu0
        %526 = vmatprep.mubr.f32.mxu0 0.0
        %527 = vmatmul.mubr.f32.gmra.mxu0 %v433
        %v528 = vpop.f32.mrf.mxu0
        %v529 = vadd.f32 %v420, %v528
        %v530 = vpop.f32.mrf.mxu0
        %531 = vmatprep.mubr.f32.mxu0 0.0
        %532 = vmatmul.mubr.f32.gmra.mxu0 %v436
        %v533 = vpop.f32.mrf.mxu0
        %v534 = vadd.f32 %v420, %v533
        %v535 = vpop.f32.mrf.mxu0
        %536 = vmatprep.mubr.f32.mxu0 0.0
        %537 = vmatmul.mubr.f32.gmra.mxu0 %v439
        %v538 = vpop.f32.mrf.mxu0
        %v539 = vadd.f32 %v420, %v538
        %v540 = vpop.f32.mrf.mxu0
        %541 = vmatprep.mubr.f32.mxu0 0.0
        %542 = vmatmul.mubr.f32.gmra.mxu0 %v442
        %v543 = vpop.f32.mrf.mxu0
        %v544 = vadd.f32 %v420, %v543
        %v545 = vpop.f32.mrf.mxu0
        %546 = vmatprep.mubr.f32.mxu0 0.0
        %547 = vmatmul.mubr.f32.gmra.mxu0 %v445
        %v548 = vpop.f32.mrf.mxu0
        %v549 = vadd.f32 %v420, %v548
        %v550 = vpop.f32.mrf.mxu0
        %551 = vdwg.mxu0
        %v552 = vmax.f32 %v514, 0.0
        %v553 = vmax.f32 %v519, 0.0
        %v554 = vmax.f32 %v524, 0.0
        %v555 = vmax.f32 %v529, 0.0
        %v556 = vmax.f32 %v534, 0.0
        %v557 = vmax.f32 %v539, 0.0
        %v558 = vmax.f32 %v544, 0.0
        %v559 = vmax.f32 %v549, 0.0
        %vm560 = vcmask 523264
        %v561 = vsel %vm560, %v552, -inf
        %v562 = vrot.slane %v561, 4
        %v563 = vmax.f32 %v561, %v562
        %v564 = vrot.slane %v563, 2
        %v565 = vmax.f32 %v563, %v564
        %v566 = vrot.slane %v565, 1
        %v567 = vmax.f32 %v565, %v566
        %v568 = vsel %vm560, %v553, -inf
        %v569 = vrot.slane %v568, 4
        %v570 = vmax.f32 %v568, %v569
        %v571 = vrot.slane %v570, 2
        %v572 = vmax.f32 %v570, %v571
        %v573 = vrot.slane %v572, 1
        %v574 = vmax.f32 %v572, %v573
        %v575 = vsel %vm560, %v554, -inf
        %v576 = vrot.slane %v575, 4
        %v577 = vmax.f32 %v575, %v576
        %v578 = vrot.slane %v577, 2
        %v579 = vmax.f32 %v577, %v578
        %v580 = vrot.slane %v579, 1
        %v581 = vmax.f32 %v579, %v580
        %v582 = vsel %vm560, %v555, -inf
        %v583 = vrot.slane %v582, 4
        %v584 = vmax.f32 %v582, %v583
        %v585 = vrot.slane %v584, 2
        %v586 = vmax.f32 %v584, %v585
        %v587 = vrot.slane %v586, 1
        %v588 = vmax.f32 %v586, %v587
        %v589 = vsel %vm560, %v556, -inf
        %v590 = vrot.slane %v589, 4
        %v591 = vmax.f32 %v589, %v590
        %v592 = vrot.slane %v591, 2
        %v593 = vmax.f32 %v591, %v592
        %v594 = vrot.slane %v593, 1
        %v595 = vmax.f32 %v593, %v594
        %v596 = vsel %vm560, %v557, -inf
        %v597 = vrot.slane %v596, 4
        %v598 = vmax.f32 %v596, %v597
        %v599 = vrot.slane %v598, 2
        %v600 = vmax.f32 %v598, %v599
        %v601 = vrot.slane %v600, 1
        %v602 = vmax.f32 %v600, %v601
        %v603 = vsel %vm560, %v558, -inf
        %v604 = vrot.slane %v603, 4
        %v605 = vmax.f32 %v603, %v604
        %v606 = vrot.slane %v605, 2
        %v607 = vmax.f32 %v605, %v606
        %v608 = vrot.slane %v607, 1
        %v609 = vmax.f32 %v607, %v608
        %v610 = vsel %vm560, %v559, -inf
        %v611 = vrot.slane %v610, 4
        %v612 = vmax.f32 %v610, %v611
        %v613 = vrot.slane %v612, 2
        %v614 = vmax.f32 %v612, %v613
        %v615 = vrot.slane %v614, 1
        %v616 = vmax.f32 %v614, %v615
        %vm625 = vcmask 1041409
        %v626 = vsel %vm625, %v574, %v567
        %vm627 = vcmask 1042434
        %v628 = vsel %vm627, %v581, %v626
        %vm629 = vcmask 1043459
        %v630 = vsel %vm629, %v588, %v628
        %vm631 = vcmask 1044484
        %v632 = vsel %vm631, %v595, %v630
        %vm633 = vcmask 1045509
        %v634 = vsel %vm633, %v602, %v632
        %vm635 = vcmask 1046534
        %v636 = vsel %vm635, %v609, %v634
        %vm637 = vcmask 1047559
        %v638 = vsel %vm637, %v616, %v636
        %640 = vst.msk [vmem:[%s242] sm:$0xff] %vm560, %v638
        %s641 = sand.u32 %s153, 1
        %s642 = scalar_lea.sflag [#allocation3], %s641
        %s643 = sand.u32 %s153, 1
        %s644 = smul.addr %s643, 8
        %s645 = scalar_lea.vmem [#allocation2], %s644
        // Predicated region
        $region41: #{tpu_custom_call.1} parent=39 // pred_check
          %p646 = pneg %p163
        $region42: #{tpu_custom_call.1} parent=39 // pred_check_branch
          %648 = sbr.rel (%p646) target = $region44
        $region43: #{tpu_custom_call.1} parent=39 // pred_region
          %s650 = ssub.s32 128, 128
          %651 = vsyncadd %s642, %s650
          %s652 = smul.addr %s23, 2
          %s653 = sadd.s32 %s24, %s652
          %s654 = smul.addr %s653, 128
          %s655 = scalar_lea.hbm %s5, %s654
          %s657 = sshll.u32 %s645, 4
          %s658 = int_to_ptr.vmem [resolvable:$true] %s657
          %660 = dma.vmem_to_hbm [thread:$0]  %s658, 128, %s655, %s642
        $region44: #{tpu_custom_call.1} parent=39 // pred_fallthru
          _
      $region40: #{tpu_custom_call.1} parent=5 // pred_fallthru
        _
      %p661 = scmp.le.s32.totalorder 2, %s14
      // Predicated region
      $region45: #{tpu_custom_call.1} parent=5 // pred_check
        %p662 = pneg %p661
      $region46: #{tpu_custom_call.1} parent=5 // pred_check_branch
        %664 = sbr.rel (%p662) target = $region48
      $region47: #{tpu_custom_call.1} parent=5 // pred_region
        %s665 = ssub.s32 %s14, 2
        // Predicated region
        $region49: #{tpu_custom_call.1} parent=47 // pred_check
          %p666 = pneg %p169
        $region50: #{tpu_custom_call.1} parent=47 // pred_check_branch
          %668 = sbr.rel (%p666) target = $region52
        $region51: #{tpu_custom_call.1} parent=47 // pred_region
          %s669 = sand.u32 %s154, 1
          %s670 = scalar_lea.sflag [#allocation3], %s669
          %s671 = sand.u32 %s154, 1
          %s672 = smul.addr %s671, 8
          %s673 = scalar_lea.vmem [#allocation2], %s672
          %674 = dma.done %s670, 128
        $region52: #{tpu_custom_call.1} parent=47 // pred_fallthru
          _
      $region48: #{tpu_custom_call.1} parent=5 // pred_fallthru
        _
    $region6: #{tpu_custom_call.1} parent=1 // loop_footer
      %s18 = sadd.s32 1, %s14
    $region7: #{tpu_custom_call.1} parent=1 // loop_footer_branch
      %13 = sbr.rel target = $region3
    $region8: #{tpu_custom_call.1} parent=1 // loop_exit
      _
    %675 = vsyncpa [#allocation3], 1
    %s676 = scalar_lea.sflag [#allocation3], 1
    %677 = vsyncpa %s676, 1

</llo_original>
